<compile_context>
chip_gen: v6e
topology: v6e:2x2x1
jax: 0.10.0
libtpu: 0.0.40
codegen_flags: <defaults>
</compile_context>

<pallas_src>
import numpy as np
import jax
import jax.numpy as jnp
from jax.experimental import pallas as pl
from jax.experimental.pallas import tpu as pltpu

NUM_BITS = 32
_LANE = 128
_SUBLANE_I8 = 32  # int8 native sublane tile


def _round_up(x: int, m: int) -> int:
    return ((x + m - 1) // m) * m


def make_decompose(num_bits_ignored: int, *, tm: int = 1024):
    """Builds a Pallas-backed decompose(value) -> int8 bit tensor (trailing bit axis)."""
    assert 0 <= num_bits_ignored < NUM_BITS
    assert tm % _SUBLANE_I8 == 0
    k_bits = NUM_BITS - num_bits_ignored
    # flip(arange(NUM_BITS))[:k_bits]  ->  [NUM_BITS-1, ..., num_bits_ignored]
    powers = tuple(range(NUM_BITS - 1, num_bits_ignored - 1, -1))
    assert len(powers) == k_bits

    def kernel(x_ref, o_ref):
        # One lane-dense (tm, 128) int8 plane per kept bit, MSB first.
        for j, p in enumerate(powers):
            bit = jnp.bitwise_and(jnp.right_shift(x_ref[...], p), 1)
            o_ref[j] = bit.astype(jnp.int8)

    def decompose(value):
        orig_shape = tuple(value.shape)
        flat = jnp.asarray(value).reshape(-1).astype(jnp.int32)
        n = int(flat.shape[0])

        # Lay elements out as (rows, 128); choose the row tile so padding waste
        # stays small while keeping per-block work large.
        rows_needed = max(1, pl.cdiv(n, _LANE))
        rows_aligned = _round_up(rows_needed, _SUBLANE_I8)
        num_blocks = pl.cdiv(rows_aligned, tm)
        tm_eff = _round_up(pl.cdiv(rows_aligned, num_blocks), _SUBLANE_I8)
        rows = num_blocks * tm_eff

        pad = rows * _LANE - n
        if pad:
            flat = jnp.pad(flat, (0, pad))
        x2d = flat.reshape(rows, _LANE)

        # Double-buffered footprint: int32 input block + k_bits int8 output planes.
        block_bytes = tm_eff * _LANE * 4 + k_bits * tm_eff * _LANE
        vmem_limit = int(min(48 << 20, max(16 << 20, 3 * block_bytes)))

        out = pl.pallas_call(
            kernel,
            out_shape=jax.ShapeDtypeStruct((k_bits, rows, _LANE), jnp.int8),
            grid=(rows // tm_eff,),
            in_specs=[pl.BlockSpec((tm_eff, _LANE), lambda i: (i, 0))],
            out_specs=pl.BlockSpec((k_bits, tm_eff, _LANE), lambda i: (0, i, 0)),
            compiler_params=pltpu.CompilerParams(
                dimension_semantics=("parallel",),
                vmem_limit_bytes=vmem_limit,
            ),
        )(x2d)

        # Restore the module's trailing-bit-axis contract with one XLA transpose.
        bits = jnp.transpose(out, (1, 2, 0))           # (rows, LANE, k_bits)
        bits = bits.reshape(rows * _LANE, k_bits)
        if pad:
            bits = bits[:n]
        return bits.reshape(orig_shape + (k_bits,))

    return decompose


def decompose_reference(value, num_bits_ignored):
    k_bits = NUM_BITS - num_bits_ignored
    powers = jnp.asarray(np.arange(NUM_BITS)[::-1][:k_bits], dtype=jnp.int32)
    v = value.astype(jnp.int32)[..., None]
    return jnp.bitwise_and(jnp.right_shift(v, powers), 1).astype(jnp.int8)


if __name__ == "__main__":
    num_bits_ignored = 8  # K = 24 bit planes kept (MSB-first)

    key = jax.random.PRNGKey(0)
    # Small NCHW-ish input, including negative values (two's complement bits).
    x = jax.random.randint(
        key, (2, 4, 16, 16), minval=-(2 ** 30), maxval=2 ** 30, dtype=jnp.int32
    )

    decompose = make_decompose(num_bits_ignored)
    out = jax.block_until_ready(decompose(x))

    ref = decompose_reference(x, num_bits_ignored)
    assert out.shape == (2, 4, 16, 16, NUM_BITS - num_bits_ignored), out.shape
    assert out.dtype == jnp.int8, out.dtype
    np.testing.assert_array_equal(np.asarray(out), np.asarray(ref))

    print("KERNEL_OK")
</pallas_src>

<mosaic_0001>
module attributes {stable_mosaic.version = 11 : i64} {
  func.func @kernel(%arg0: i32, %arg1: memref<32x128xi32, #tpu.memory_space<vmem>>, %arg2: memref<24x32x128xi8, #tpu.memory_space<vmem>>) attributes {dimension_semantics = [#tpu.dimension_semantics<parallel>], iteration_bounds = array<i64: 1>, scalar_prefetch = 0 : i64, scratch_operands = 0 : i64, tpu.core_type = #tpu.core_type<tc>, window_params = [{transform_indices = @transform_0, window_bounds = array<i64: 32, 128>}, {transform_indices = @transform_1, window_bounds = array<i64: 24, 32, 128>}]} {
    %c0 = arith.constant 0 : index
    %c0_0 = arith.constant 0 : index
    %0 = vector.load %arg1[%c0, %c0_0] : memref<32x128xi32, #tpu.memory_space<vmem>>, vector<32x128xi32>
    %c31_i32 = arith.constant 31 : i32
    %1 = vector.broadcast %c31_i32 : i32 to vector<32x128xi32>
    %2 = arith.shrsi %0, %1 : vector<32x128xi32>
    %c1_i32 = arith.constant 1 : i32
    %3 = vector.broadcast %c1_i32 : i32 to vector<32x128xi32>
    %4 = arith.andi %2, %3 : vector<32x128xi32>
    %5 = arith.trunci %4 : vector<32x128xi32> to vector<32x128xi8>
    %c0_1 = arith.constant 0 : index
    %c0_2 = arith.constant 0 : index
    %c0_3 = arith.constant 0 : index
    %6 = vector.load %arg2[%c0_1, %c0_2, %c0_3] : memref<24x32x128xi8, #tpu.memory_space<vmem>>, vector<1x32x128xi8>
    %7 = vector.shape_cast %6 : vector<1x32x128xi8> to vector<32x128xi8>
    %8 = vector.shape_cast %5 : vector<32x128xi8> to vector<1x32x128xi8>
    tpu.vector_store %arg2[%c0_1, %c0_2, %c0_3], %8 {strides = array<i32>} : memref<24x32x128xi8, #tpu.memory_space<vmem>>, vector<1x32x128xi8>,
    %c0_4 = arith.constant 0 : index
    %c0_5 = arith.constant 0 : index
    %9 = vector.load %arg1[%c0_4, %c0_5] : memref<32x128xi32, #tpu.memory_space<vmem>>, vector<32x128xi32>
    %c30_i32 = arith.constant 30 : i32
    %10 = vector.broadcast %c30_i32 : i32 to vector<32x128xi32>
    %11 = arith.shrsi %9, %10 : vector<32x128xi32>
    %c1_i32_6 = arith.constant 1 : i32
    %12 = vector.broadcast %c1_i32_6 : i32 to vector<32x128xi32>
    %13 = arith.andi %11, %12 : vector<32x128xi32>
    %14 = arith.trunci %13 : vector<32x128xi32> to vector<32x128xi8>
    %c1 = arith.constant 1 : index
    %c0_7 = arith.constant 0 : index
    %c0_8 = arith.constant 0 : index
    %15 = vector.load %arg2[%c1, %c0_7, %c0_8] : memref<24x32x128xi8, #tpu.memory_space<vmem>>, vector<1x32x128xi8>
    %16 = vector.shape_cast %15 : vector<1x32x128xi8> to vector<32x128xi8>
    %17 = vector.shape_cast %14 : vector<32x128xi8> to vector<1x32x128xi8>
    tpu.vector_store %arg2[%c1, %c0_7, %c0_8], %17 {strides = array<i32>} : memref<24x32x128xi8, #tpu.memory_space<vmem>>, vector<1x32x128xi8>,
    %c0_9 = arith.constant 0 : index
    %c0_10 = arith.constant 0 : index
    %18 = vector.load %arg1[%c0_9, %c0_10] : memref<32x128xi32, #tpu.memory_space<vmem>>, vector<32x128xi32>
    %c29_i32 = arith.constant 29 : i32
    %19 = vector.broadcast %c29_i32 : i32 to vector<32x128xi32>
    %20 = arith.shrsi %18, %19 : vector<32x128xi32>
    %c1_i32_11 = arith.constant 1 : i32
    %21 = vector.broadcast %c1_i32_11 : i32 to vector<32x128xi32>
    %22 = arith.andi %20, %21 : vector<32x128xi32>
    %23 = arith.trunci %22 : vector<32x128xi32> to vector<32x128xi8>
    %c2 = arith.constant 2 : index
    %c0_12 = arith.constant 0 : index
    %c0_13 = arith.constant 0 : index
    %24 = vector.load %arg2[%c2, %c0_12, %c0_13] : memref<24x32x128xi8, #tpu.memory_space<vmem>>, vector<1x32x128xi8>
    %25 = vector.shape_cast %24 : vector<1x32x128xi8> to vector<32x128xi8>
    %26 = vector.shape_cast %23 : vector<32x128xi8> to vector<1x32x128xi8>
    tpu.vector_store %arg2[%c2, %c0_12, %c0_13], %26 {strides = array<i32>} : memref<24x32x128xi8, #tpu.memory_space<vmem>>, vector<1x32x128xi8>,
    %c0_14 = arith.constant 0 : index
    %c0_15 = arith.constant 0 : index
    %27 = vector.load %arg1[%c0_14, %c0_15] : memref<32x128xi32, #tpu.memory_space<vmem>>, vector<32x128xi32>
    %c28_i32 = arith.constant 28 : i32
    %28 = vector.broadcast %c28_i32 : i32 to vector<32x128xi32>
    %29 = arith.shrsi %27, %28 : vector<32x128xi32>
    %c1_i32_16 = arith.constant 1 : i32
    %30 = vector.broadcast %c1_i32_16 : i32 to vector<32x128xi32>
    %31 = arith.andi %29, %30 : vector<32x128xi32>
    %32 = arith.trunci %31 : vector<32x128xi32> to vector<32x128xi8>
    %c3 = arith.constant 3 : index
    %c0_17 = arith.constant 0 : index
    %c0_18 = arith.constant 0 : index
    %33 = vector.load %arg2[%c3, %c0_17, %c0_18] : memref<24x32x128xi8, #tpu.memory_space<vmem>>, vector<1x32x128xi8>
    %34 = vector.shape_cast %33 : vector<1x32x128xi8> to vector<32x128xi8>
    %35 = vector.shape_cast %32 : vector<32x128xi8> to vector<1x32x128xi8>
    tpu.vector_store %arg2[%c3, %c0_17, %c0_18], %35 {strides = array<i32>} : memref<24x32x128xi8, #tpu.memory_space<vmem>>, vector<1x32x128xi8>,
    %c0_19 = arith.constant 0 : index
    %c0_20 = arith.constant 0 : index
    %36 = vector.load %arg1[%c0_19, %c0_20] : memref<32x128xi32, #tpu.memory_space<vmem>>, vector<32x128xi32>
    %c27_i32 = arith.constant 27 : i32
    %37 = vector.broadcast %c27_i32 : i32 to vector<32x128xi32>
    %38 = arith.shrsi %36, %37 : vector<32x128xi32>
    %c1_i32_21 = arith.constant 1 : i32
    %39 = vector.broadcast %c1_i32_21 : i32 to vector<32x128xi32>
    %40 = arith.andi %38, %39 : vector<32x128xi32>
    %41 = arith.trunci %40 : vector<32x128xi32> to vector<32x128xi8>
    %c4 = arith.constant 4 : index
    %c0_22 = arith.constant 0 : index
    %c0_23 = arith.constant 0 : index
    %42 = vector.load %arg2[%c4, %c0_22, %c0_23] : memref<24x32x128xi8, #tpu.memory_space<vmem>>, vector<1x32x128xi8>
    %43 = vector.shape_cast %42 : vector<1x32x128xi8> to vector<32x128xi8>
    %44 = vector.shape_cast %41 : vector<32x128xi8> to vector<1x32x128xi8>
    tpu.vector_store %arg2[%c4, %c0_22, %c0_23], %44 {strides = array<i32>} : memref<24x32x128xi8, #tpu.memory_space<vmem>>, vector<1x32x128xi8>,
    %c0_24 = arith.constant 0 : index
    %c0_25 = arith.constant 0 : index
    %45 = vector.load %arg1[%c0_24, %c0_25] : memref<32x128xi32, #tpu.memory_space<vmem>>, vector<32x128xi32>
    %c26_i32 = arith.constant 26 : i32
    %46 = vector.broadcast %c26_i32 : i32 to vector<32x128xi32>
    %47 = arith.shrsi %45, %46 : vector<32x128xi32>
    %c1_i32_26 = arith.constant 1 : i32
    %48 = vector.broadcast %c1_i32_26 : i32 to vector<32x128xi32>
    %49 = arith.andi %47, %48 : vector<32x128xi32>
    %50 = arith.trunci %49 : vector<32x128xi32> to vector<32x128xi8>
    %c5 = arith.constant 5 : index
    %c0_27 = arith.constant 0 : index
    %c0_28 = arith.constant 0 : index
    %51 = vector.load %arg2[%c5, %c0_27, %c0_28] : memref<24x32x128xi8, #tpu.memory_space<vmem>>, vector<1x32x128xi8>
    %52 = vector.shape_cast %51 : vector<1x32x128xi8> to vector<32x128xi8>
    %53 = vector.shape_cast %50 : vector<32x128xi8> to vector<1x32x128xi8>
    tpu.vector_store %arg2[%c5, %c0_27, %c0_28], %53 {strides = array<i32>} : memref<24x32x128xi8, #tpu.memory_space<vmem>>, vector<1x32x128xi8>,
    %c0_29 = arith.constant 0 : index
    %c0_30 = arith.constant 0 : index
    %54 = vector.load %arg1[%c0_29, %c0_30] : memref<32x128xi32, #tpu.memory_space<vmem>>, vector<32x128xi32>
    %c25_i32 = arith.constant 25 : i32
    %55 = vector.broadcast %c25_i32 : i32 to vector<32x128xi32>
    %56 = arith.shrsi %54, %55 : vector<32x128xi32>
    %c1_i32_31 = arith.constant 1 : i32
    %57 = vector.broadcast %c1_i32_31 : i32 to vector<32x128xi32>
    %58 = arith.andi %56, %57 : vector<32x128xi32>
    %59 = arith.trunci %58 : vector<32x128xi32> to vector<32x128xi8>
    %c6 = arith.constant 6 : index
    %c0_32 = arith.constant 0 : index
    %c0_33 = arith.constant 0 : index
    %60 = vector.load %arg2[%c6, %c0_32, %c0_33] : memref<24x32x128xi8, #tpu.memory_space<vmem>>, vector<1x32x128xi8>
    %61 = vector.shape_cast %60 : vector<1x32x128xi8> to vector<32x128xi8>
    %62 = vector.shape_cast %59 : vector<32x128xi8> to vector<1x32x128xi8>
    tpu.vector_store %arg2[%c6, %c0_32, %c0_33], %62 {strides = array<i32>} : memref<24x32x128xi8, #tpu.memory_space<vmem>>, vector<1x32x128xi8>,
    %c0_34 = arith.constant 0 : index
    %c0_35 = arith.constant 0 : index
    %63 = vector.load %arg1[%c0_34, %c0_35] : memref<32x128xi32, #tpu.memory_space<vmem>>, vector<32x128xi32>
    %c24_i32 = arith.constant 24 : i32
    %64 = vector.broadcast %c24_i32 : i32 to vector<32x128xi32>
    %65 = arith.shrsi %63, %64 : vector<32x128xi32>
    %c1_i32_36 = arith.constant 1 : i32
    %66 = vector.broadcast %c1_i32_36 : i32 to vector<32x128xi32>
    %67 = arith.andi %65, %66 : vector<32x128xi32>
    %68 = arith.trunci %67 : vector<32x128xi32> to vector<32x128xi8>
    %c7 = arith.constant 7 : index
    %c0_37 = arith.constant 0 : index
    %c0_38 = arith.constant 0 : index
    %69 = vector.load %arg2[%c7, %c0_37, %c0_38] : memref<24x32x128xi8, #tpu.memory_space<vmem>>, vector<1x32x128xi8>
    %70 = vector.shape_cast %69 : vector<1x32x128xi8> to vector<32x128xi8>
    %71 = vector.shape_cast %68 : vector<32x128xi8> to vector<1x32x128xi8>
    tpu.vector_store %arg2[%c7, %c0_37, %c0_38], %71 {strides = array<i32>} : memref<24x32x128xi8, #tpu.memory_space<vmem>>, vector<1x32x128xi8>,
    %c0_39 = arith.constant 0 : index
    %c0_40 = arith.constant 0 : index
    %72 = vector.load %arg1[%c0_39, %c0_40] : memref<32x128xi32, #tpu.memory_space<vmem>>, vector<32x128xi32>
    %c23_i32 = arith.constant 23 : i32
    %73 = vector.broadcast %c23_i32 : i32 to vector<32x128xi32>
    %74 = arith.shrsi %72, %73 : vector<32x128xi32>
    %c1_i32_41 = arith.constant 1 : i32
    %75 = vector.broadcast %c1_i32_41 : i32 to vector<32x128xi32>
    %76 = arith.andi %74, %75 : vector<32x128xi32>
    %77 = arith.trunci %76 : vector<32x128xi32> to vector<32x128xi8>
    %c8 = arith.constant 8 : index
    %c0_42 = arith.constant 0 : index
    %c0_43 = arith.constant 0 : index
    %78 = vector.load %arg2[%c8, %c0_42, %c0_43] : memref<24x32x128xi8, #tpu.memory_space<vmem>>, vector<1x32x128xi8>
    %79 = vector.shape_cast %78 : vector<1x32x128xi8> to vector<32x128xi8>
    %80 = vector.shape_cast %77 : vector<32x128xi8> to vector<1x32x128xi8>
    tpu.vector_store %arg2[%c8, %c0_42, %c0_43], %80 {strides = array<i32>} : memref<24x32x128xi8, #tpu.memory_space<vmem>>, vector<1x32x128xi8>,
    %c0_44 = arith.constant 0 : index
    %c0_45 = arith.constant 0 : index
    %81 = vector.load %arg1[%c0_44, %c0_45] : memref<32x128xi32, #tpu.memory_space<vmem>>, vector<32x128xi32>
    %c22_i32 = arith.constant 22 : i32
    %82 = vector.broadcast %c22_i32 : i32 to vector<32x128xi32>
    %83 = arith.shrsi %81, %82 : vector<32x128xi32>
    %c1_i32_46 = arith.constant 1 : i32
    %84 = vector.broadcast %c1_i32_46 : i32 to vector<32x128xi32>
    %85 = arith.andi %83, %84 : vector<32x128xi32>
    %86 = arith.trunci %85 : vector<32x128xi32> to vector<32x128xi8>
    %c9 = arith.constant 9 : index
    %c0_47 = arith.constant 0 : index
    %c0_48 = arith.constant 0 : index
    %87 = vector.load %arg2[%c9, %c0_47, %c0_48] : memref<24x32x128xi8, #tpu.memory_space<vmem>>, vector<1x32x128xi8>
    %88 = vector.shape_cast %87 : vector<1x32x128xi8> to vector<32x128xi8>
    %89 = vector.shape_cast %86 : vector<32x128xi8> to vector<1x32x128xi8>
    tpu.vector_store %arg2[%c9, %c0_47, %c0_48], %89 {strides = array<i32>} : memref<24x32x128xi8, #tpu.memory_space<vmem>>, vector<1x32x128xi8>,
    %c0_49 = arith.constant 0 : index
    %c0_50 = arith.constant 0 : index
    %90 = vector.load %arg1[%c0_49, %c0_50] : memref<32x128xi32, #tpu.memory_space<vmem>>, vector<32x128xi32>
    %c21_i32 = arith.constant 21 : i32
    %91 = vector.broadcast %c21_i32 : i32 to vector<32x128xi32>
    %92 = arith.shrsi %90, %91 : vector<32x128xi32>
    %c1_i32_51 = arith.constant 1 : i32
    %93 = vector.broadcast %c1_i32_51 : i32 to vector<32x128xi32>
    %94 = arith.andi %92, %93 : vector<32x128xi32>
    %95 = arith.trunci %94 : vector<32x128xi32> to vector<32x128xi8>
    %c10 = arith.constant 10 : index
    %c0_52 = arith.constant 0 : index
    %c0_53 = arith.constant 0 : index
    %96 = vector.load %arg2[%c10, %c0_52, %c0_53] : memref<24x32x128xi8, #tpu.memory_space<vmem>>, vector<1x32x128xi8>
    %97 = vector.shape_cast %96 : vector<1x32x128xi8> to vector<32x128xi8>
    %98 = vector.shape_cast %95 : vector<32x128xi8> to vector<1x32x128xi8>
    tpu.vector_store %arg2[%c10, %c0_52, %c0_53], %98 {strides = array<i32>} : memref<24x32x128xi8, #tpu.memory_space<vmem>>, vector<1x32x128xi8>,
    %c0_54 = arith.constant 0 : index
    %c0_55 = arith.constant 0 : index
    %99 = vector.load %arg1[%c0_54, %c0_55] : memref<32x128xi32, #tpu.memory_space<vmem>>, vector<32x128xi32>
    %c20_i32 = arith.constant 20 : i32
    %100 = vector.broadcast %c20_i32 : i32 to vector<32x128xi32>
    %101 = arith.shrsi %99, %100 : vector<32x128xi32>
    %c1_i32_56 = arith.constant 1 : i32
    %102 = vector.broadcast %c1_i32_56 : i32 to vector<32x128xi32>
    %103 = arith.andi %101, %102 : vector<32x128xi32>
    %104 = arith.trunci %103 : vector<32x128xi32> to vector<32x128xi8>
    %c11 = arith.constant 11 : index
    %c0_57 = arith.constant 0 : index
    %c0_58 = arith.constant 0 : index
    %105 = vector.load %arg2[%c11, %c0_57, %c0_58] : memref<24x32x128xi8, #tpu.memory_space<vmem>>, vector<1x32x128xi8>
    %106 = vector.shape_cast %105 : vector<1x32x128xi8> to vector<32x128xi8>
    %107 = vector.shape_cast %104 : vector<32x128xi8> to vector<1x32x128xi8>
    tpu.vector_store %arg2[%c11, %c0_57, %c0_58], %107 {strides = array<i32>} : memref<24x32x128xi8, #tpu.memory_space<vmem>>, vector<1x32x128xi8>,
    %c0_59 = arith.constant 0 : index
    %c0_60 = arith.constant 0 : index
    %108 = vector.load %arg1[%c0_59, %c0_60] : memref<32x128xi32, #tpu.memory_space<vmem>>, vector<32x128xi32>
    %c19_i32 = arith.constant 19 : i32
    %109 = vector.broadcast %c19_i32 : i32 to vector<32x128xi32>
    %110 = arith.shrsi %108, %109 : vector<32x128xi32>
    %c1_i32_61 = arith.constant 1 : i32
    %111 = vector.broadcast %c1_i32_61 : i32 to vector<32x128xi32>
    %112 = arith.andi %110, %111 : vector<32x128xi32>
    %113 = arith.trunci %112 : vector<32x128xi32> to vector<32x128xi8>
    %c12 = arith.constant 12 : index
    %c0_62 = arith.constant 0 : index
    %c0_63 = arith.constant 0 : index
    %114 = vector.load %arg2[%c12, %c0_62, %c0_63] : memref<24x32x128xi8, #tpu.memory_space<vmem>>, vector<1x32x128xi8>
    %115 = vector.shape_cast %114 : vector<1x32x128xi8> to vector<32x128xi8>
    %116 = vector.shape_cast %113 : vector<32x128xi8> to vector<1x32x128xi8>
    tpu.vector_store %arg2[%c12, %c0_62, %c0_63], %116 {strides = array<i32>} : memref<24x32x128xi8, #tpu.memory_space<vmem>>, vector<1x32x128xi8>,
    %c0_64 = arith.constant 0 : index
    %c0_65 = arith.constant 0 : index
    %117 = vector.load %arg1[%c0_64, %c0_65] : memref<32x128xi32, #tpu.memory_space<vmem>>, vector<32x128xi32>
    %c18_i32 = arith.constant 18 : i32
    %118 = vector.broadcast %c18_i32 : i32 to vector<32x128xi32>
    %119 = arith.shrsi %117, %118 : vector<32x128xi32>
    %c1_i32_66 = arith.constant 1 : i32
    %120 = vector.broadcast %c1_i32_66 : i32 to vector<32x128xi32>
    %121 = arith.andi %119, %120 : vector<32x128xi32>
    %122 = arith.trunci %121 : vector<32x128xi32> to vector<32x128xi8>
    %c13 = arith.constant 13 : index
    %c0_67 = arith.constant 0 : index
    %c0_68 = arith.constant 0 : index
    %123 = vector.load %arg2[%c13, %c0_67, %c0_68] : memref<24x32x128xi8, #tpu.memory_space<vmem>>, vector<1x32x128xi8>
    %124 = vector.shape_cast %123 : vector<1x32x128xi8> to vector<32x128xi8>
    %125 = vector.shape_cast %122 : vector<32x128xi8> to vector<1x32x128xi8>
    tpu.vector_store %arg2[%c13, %c0_67, %c0_68], %125 {strides = array<i32>} : memref<24x32x128xi8, #tpu.memory_space<vmem>>, vector<1x32x128xi8>,
    %c0_69 = arith.constant 0 : index
    %c0_70 = arith.constant 0 : index
    %126 = vector.load %arg1[%c0_69, %c0_70] : memref<32x128xi32, #tpu.memory_space<vmem>>, vector<32x128xi32>
    %c17_i32 = arith.constant 17 : i32
    %127 = vector.broadcast %c17_i32 : i32 to vector<32x128xi32>
    %128 = arith.shrsi %126, %127 : vector<32x128xi32>
    %c1_i32_71 = arith.constant 1 : i32
    %129 = vector.broadcast %c1_i32_71 : i32 to vector<32x128xi32>
    %130 = arith.andi %128, %129 : vector<32x128xi32>
    %131 = arith.trunci %130 : vector<32x128xi32> to vector<32x128xi8>
    %c14 = arith.constant 14 : index
    %c0_72 = arith.constant 0 : index
    %c0_73 = arith.constant 0 : index
    %132 = vector.load %arg2[%c14, %c0_72, %c0_73] : memref<24x32x128xi8, #tpu.memory_space<vmem>>, vector<1x32x128xi8>
    %133 = vector.shape_cast %132 : vector<1x32x128xi8> to vector<32x128xi8>
    %134 = vector.shape_cast %131 : vector<32x128xi8> to vector<1x32x128xi8>
    tpu.vector_store %arg2[%c14, %c0_72, %c0_73], %134 {strides = array<i32>} : memref<24x32x128xi8, #tpu.memory_space<vmem>>, vector<1x32x128xi8>,
    %c0_74 = arith.constant 0 : index
    %c0_75 = arith.constant 0 : index
    %135 = vector.load %arg1[%c0_74, %c0_75] : memref<32x128xi32, #tpu.memory_space<vmem>>, vector<32x128xi32>
    %c16_i32 = arith.constant 16 : i32
    %136 = vector.broadcast %c16_i32 : i32 to vector<32x128xi32>
    %137 = arith.shrsi %135, %136 : vector<32x128xi32>
    %c1_i32_76 = arith.constant 1 : i32
    %138 = vector.broadcast %c1_i32_76 : i32 to vector<32x128xi32>
    %139 = arith.andi %137, %138 : vector<32x128xi32>
    %140 = arith.trunci %139 : vector<32x128xi32> to vector<32x128xi8>
    %c15 = arith.constant 15 : index
    %c0_77 = arith.constant 0 : index
    %c0_78 = arith.constant 0 : index
    %141 = vector.load %arg2[%c15, %c0_77, %c0_78] : memref<24x32x128xi8, #tpu.memory_space<vmem>>, vector<1x32x128xi8>
    %142 = vector.shape_cast %141 : vector<1x32x128xi8> to vector<32x128xi8>
    %143 = vector.shape_cast %140 : vector<32x128xi8> to vector<1x32x128xi8>
    tpu.vector_store %arg2[%c15, %c0_77, %c0_78], %143 {strides = array<i32>} : memref<24x32x128xi8, #tpu.memory_space<vmem>>, vector<1x32x128xi8>,
    %c0_79 = arith.constant 0 : index
    %c0_80 = arith.constant 0 : index
    %144 = vector.load %arg1[%c0_79, %c0_80] : memref<32x128xi32, #tpu.memory_space<vmem>>, vector<32x128xi32>
    %c15_i32 = arith.constant 15 : i32
    %145 = vector.broadcast %c15_i32 : i32 to vector<32x128xi32>
    %146 = arith.shrsi %144, %145 : vector<32x128xi32>
    %c1_i32_81 = arith.constant 1 : i32
    %147 = vector.broadcast %c1_i32_81 : i32 to vector<32x128xi32>
    %148 = arith.andi %146, %147 : vector<32x128xi32>
    %149 = arith.trunci %148 : vector<32x128xi32> to vector<32x128xi8>
    %c16 = arith.constant 16 : index
    %c0_82 = arith.constant 0 : index
    %c0_83 = arith.constant 0 : index
    %150 = vector.load %arg2[%c16, %c0_82, %c0_83] : memref<24x32x128xi8, #tpu.memory_space<vmem>>, vector<1x32x128xi8>
    %151 = vector.shape_cast %150 : vector<1x32x128xi8> to vector<32x128xi8>
    %152 = vector.shape_cast %149 : vector<32x128xi8> to vector<1x32x128xi8>
    tpu.vector_store %arg2[%c16, %c0_82, %c0_83], %152 {strides = array<i32>} : memref<24x32x128xi8, #tpu.memory_space<vmem>>, vector<1x32x128xi8>,
    %c0_84 = arith.constant 0 : index
    %c0_85 = arith.constant 0 : index
    %153 = vector.load %arg1[%c0_84, %c0_85] : memref<32x128xi32, #tpu.memory_space<vmem>>, vector<32x128xi32>
    %c14_i32 = arith.constant 14 : i32
    %154 = vector.broadcast %c14_i32 : i32 to vector<32x128xi32>
    %155 = arith.shrsi %153, %154 : vector<32x128xi32>
    %c1_i32_86 = arith.constant 1 : i32
    %156 = vector.broadcast %c1_i32_86 : i32 to vector<32x128xi32>
    %157 = arith.andi %155, %156 : vector<32x128xi32>
    %158 = arith.trunci %157 : vector<32x128xi32> to vector<32x128xi8>
    %c17 = arith.constant 17 : index
    %c0_87 = arith.constant 0 : index
    %c0_88 = arith.constant 0 : index
    %159 = vector.load %arg2[%c17, %c0_87, %c0_88] : memref<24x32x128xi8, #tpu.memory_space<vmem>>, vector<1x32x128xi8>
    %160 = vector.shape_cast %159 : vector<1x32x128xi8> to vector<32x128xi8>
    %161 = vector.shape_cast %158 : vector<32x128xi8> to vector<1x32x128xi8>
    tpu.vector_store %arg2[%c17, %c0_87, %c0_88], %161 {strides = array<i32>} : memref<24x32x128xi8, #tpu.memory_space<vmem>>, vector<1x32x128xi8>,
    %c0_89 = arith.constant 0 : index
    %c0_90 = arith.constant 0 : index
    %162 = vector.load %arg1[%c0_89, %c0_90] : memref<32x128xi32, #tpu.memory_space<vmem>>, vector<32x128xi32>
    %c13_i32 = arith.constant 13 : i32
    %163 = vector.broadcast %c13_i32 : i32 to vector<32x128xi32>
    %164 = arith.shrsi %162, %163 : vector<32x128xi32>
    %c1_i32_91 = arith.constant 1 : i32
    %165 = vector.broadcast %c1_i32_91 : i32 to vector<32x128xi32>
    %166 = arith.andi %164, %165 : vector<32x128xi32>
    %167 = arith.trunci %166 : vector<32x128xi32> to vector<32x128xi8>
    %c18 = arith.constant 18 : index
    %c0_92 = arith.constant 0 : index
    %c0_93 = arith.constant 0 : index
    %168 = vector.load %arg2[%c18, %c0_92, %c0_93] : memref<24x32x128xi8, #tpu.memory_space<vmem>>, vector<1x32x128xi8>
    %169 = vector.shape_cast %168 : vector<1x32x128xi8> to vector<32x128xi8>
    %170 = vector.shape_cast %167 : vector<32x128xi8> to vector<1x32x128xi8>
    tpu.vector_store %arg2[%c18, %c0_92, %c0_93], %170 {strides = array<i32>} : memref<24x32x128xi8, #tpu.memory_space<vmem>>, vector<1x32x128xi8>,
    %c0_94 = arith.constant 0 : index
    %c0_95 = arith.constant 0 : index
    %171 = vector.load %arg1[%c0_94, %c0_95] : memref<32x128xi32, #tpu.memory_space<vmem>>, vector<32x128xi32>
    %c12_i32 = arith.constant 12 : i32
    %172 = vector.broadcast %c12_i32 : i32 to vector<32x128xi32>
    %173 = arith.shrsi %171, %172 : vector<32x128xi32>
    %c1_i32_96 = arith.constant 1 : i32
    %174 = vector.broadcast %c1_i32_96 : i32 to vector<32x128xi32>
    %175 = arith.andi %173, %174 : vector<32x128xi32>
    %176 = arith.trunci %175 : vector<32x128xi32> to vector<32x128xi8>
    %c19 = arith.constant 19 : index
    %c0_97 = arith.constant 0 : index
    %c0_98 = arith.constant 0 : index
    %177 = vector.load %arg2[%c19, %c0_97, %c0_98] : memref<24x32x128xi8, #tpu.memory_space<vmem>>, vector<1x32x128xi8>
    %178 = vector.shape_cast %177 : vector<1x32x128xi8> to vector<32x128xi8>
    %179 = vector.shape_cast %176 : vector<32x128xi8> to vector<1x32x128xi8>
    tpu.vector_store %arg2[%c19, %c0_97, %c0_98], %179 {strides = array<i32>} : memref<24x32x128xi8, #tpu.memory_space<vmem>>, vector<1x32x128xi8>,
    %c0_99 = arith.constant 0 : index
    %c0_100 = arith.constant 0 : index
    %180 = vector.load %arg1[%c0_99, %c0_100] : memref<32x128xi32, #tpu.memory_space<vmem>>, vector<32x128xi32>
    %c11_i32 = arith.constant 11 : i32
    %181 = vector.broadcast %c11_i32 : i32 to vector<32x128xi32>
    %182 = arith.shrsi %180, %181 : vector<32x128xi32>
    %c1_i32_101 = arith.constant 1 : i32
    %183 = vector.broadcast %c1_i32_101 : i32 to vector<32x128xi32>
    %184 = arith.andi %182, %183 : vector<32x128xi32>
    %185 = arith.trunci %184 : vector<32x128xi32> to vector<32x128xi8>
    %c20 = arith.constant 20 : index
    %c0_102 = arith.constant 0 : index
    %c0_103 = arith.constant 0 : index
    %186 = vector.load %arg2[%c20, %c0_102, %c0_103] : memref<24x32x128xi8, #tpu.memory_space<vmem>>, vector<1x32x128xi8>
    %187 = vector.shape_cast %186 : vector<1x32x128xi8> to vector<32x128xi8>
    %188 = vector.shape_cast %185 : vector<32x128xi8> to vector<1x32x128xi8>
    tpu.vector_store %arg2[%c20, %c0_102, %c0_103], %188 {strides = array<i32>} : memref<24x32x128xi8, #tpu.memory_space<vmem>>, vector<1x32x128xi8>,
    %c0_104 = arith.constant 0 : index
    %c0_105 = arith.constant 0 : index
    %189 = vector.load %arg1[%c0_104, %c0_105] : memref<32x128xi32, #tpu.memory_space<vmem>>, vector<32x128xi32>
    %c10_i32 = arith.constant 10 : i32
    %190 = vector.broadcast %c10_i32 : i32 to vector<32x128xi32>
    %191 = arith.shrsi %189, %190 : vector<32x128xi32>
    %c1_i32_106 = arith.constant 1 : i32
    %192 = vector.broadcast %c1_i32_106 : i32 to vector<32x128xi32>
    %193 = arith.andi %191, %192 : vector<32x128xi32>
    %194 = arith.trunci %193 : vector<32x128xi32> to vector<32x128xi8>
    %c21 = arith.constant 21 : index
    %c0_107 = arith.constant 0 : index
    %c0_108 = arith.constant 0 : index
    %195 = vector.load %arg2[%c21, %c0_107, %c0_108] : memref<24x32x128xi8, #tpu.memory_space<vmem>>, vector<1x32x128xi8>
    %196 = vector.shape_cast %195 : vector<1x32x128xi8> to vector<32x128xi8>
    %197 = vector.shape_cast %194 : vector<32x128xi8> to vector<1x32x128xi8>
    tpu.vector_store %arg2[%c21, %c0_107, %c0_108], %197 {strides = array<i32>} : memref<24x32x128xi8, #tpu.memory_space<vmem>>, vector<1x32x128xi8>,
    %c0_109 = arith.constant 0 : index
    %c0_110 = arith.constant 0 : index
    %198 = vector.load %arg1[%c0_109, %c0_110] : memref<32x128xi32, #tpu.memory_space<vmem>>, vector<32x128xi32>
    %c9_i32 = arith.constant 9 : i32
    %199 = vector.broadcast %c9_i32 : i32 to vector<32x128xi32>
    %200 = arith.shrsi %198, %199 : vector<32x128xi32>
    %c1_i32_111 = arith.constant 1 : i32
    %201 = vector.broadcast %c1_i32_111 : i32 to vector<32x128xi32>
    %202 = arith.andi %200, %201 : vector<32x128xi32>
    %203 = arith.trunci %202 : vector<32x128xi32> to vector<32x128xi8>
    %c22 = arith.constant 22 : index
    %c0_112 = arith.constant 0 : index
    %c0_113 = arith.constant 0 : index
    %204 = vector.load %arg2[%c22, %c0_112, %c0_113] : memref<24x32x128xi8, #tpu.memory_space<vmem>>, vector<1x32x128xi8>
    %205 = vector.shape_cast %204 : vector<1x32x128xi8> to vector<32x128xi8>
    %206 = vector.shape_cast %203 : vector<32x128xi8> to vector<1x32x128xi8>
    tpu.vector_store %arg2[%c22, %c0_112, %c0_113], %206 {strides = array<i32>} : memref<24x32x128xi8, #tpu.memory_space<vmem>>, vector<1x32x128xi8>,
    %c0_114 = arith.constant 0 : index
    %c0_115 = arith.constant 0 : index
    %207 = vector.load %arg1[%c0_114, %c0_115] : memref<32x128xi32, #tpu.memory_space<vmem>>, vector<32x128xi32>
    %c8_i32 = arith.constant 8 : i32
    %208 = vector.broadcast %c8_i32 : i32 to vector<32x128xi32>
    %209 = arith.shrsi %207, %208 : vector<32x128xi32>
    %c1_i32_116 = arith.constant 1 : i32
    %210 = vector.broadcast %c1_i32_116 : i32 to vector<32x128xi32>
    %211 = arith.andi %209, %210 : vector<32x128xi32>
    %212 = arith.trunci %211 : vector<32x128xi32> to vector<32x128xi8>
    %c23 = arith.constant 23 : index
    %c0_117 = arith.constant 0 : index
    %c0_118 = arith.constant 0 : index
    %213 = vector.load %arg2[%c23, %c0_117, %c0_118] : memref<24x32x128xi8, #tpu.memory_space<vmem>>, vector<1x32x128xi8>
    %214 = vector.shape_cast %213 : vector<1x32x128xi8> to vector<32x128xi8>
    %215 = vector.shape_cast %212 : vector<32x128xi8> to vector<1x32x128xi8>
    tpu.vector_store %arg2[%c23, %c0_117, %c0_118], %215 {strides = array<i32>} : memref<24x32x128xi8, #tpu.memory_space<vmem>>, vector<1x32x128xi8>,
    return
  }
  func.func @transform_0(%arg0: i32) -> (i32, i32) {
    %c0_i32 = arith.constant 0 : i32
    %c0_i32_0 = arith.constant 0 : i32
    return %arg0, %c0_i32 : i32, i32
  }
  func.func @transform_1(%arg0: i32) -> (i32, i32, i32) {
    %c0_i32 = arith.constant 0 : i32
    %c0_i32_0 = arith.constant 0 : i32
    %c0_i32_1 = arith.constant 0 : i32
    return %c0_i32, %arg0, %c0_i32_0 : i32, i32, i32
  }
}

</mosaic_0001>

<llo_original>
// kernel: tpu_custom_call.1
$region0: #{tpu_custom_call.1}
  #allocation0 [shape = 'u32[]', space=smem, size = 0x4, offset = 0x4, fixed_abs, tag = 'smem constant byte address 0x4 - core index']
  #allocation1 [shape = 'u32[144,128]{1,0:T(1,128)}', space=vmem, size = 0x12000, scoped, tag = 'internal scratch']
  %s0 = inlined_call_operand.hbm [shape: s32[32,128], index: 0, kind: input, shape index: {}]
  %s1 = inlined_call_operand.hbm [shape: s8[24,32,128], index: 1, kind: output, shape index: {}]
  %s2 = sld [smem:[#allocation0]]
  $region18: #{tpu_custom_call.1} parent=0
    _
  %s4 = ssub.s32 1, %s2
  %s5 = scalar_select 0, %s4, %s2
  $region1: #{tpu_custom_call.1} parent=0
    #allocation2 [shape = 'u8[16384]{0}', space=vmem, size = 0x4000, scoped, tag = 'input window, operand 0, single buffered']
    #allocation3 [shape = 's32[1]{0}', space=sflag, size = 0x4, scoped, tag = 'scoped memory for tpu_custom_call.1']
    #allocation4 [shape = 's32[1]{0}', space=sflag, size = 0x4, scoped, tag = 'scoped memory for tpu_custom_call.1']
    #allocation5 [shape = 'u8[98304]{0}', space=vmem, size = 0x18000, scoped, tag = 'output window, operand 0, single buffered']
    %6 = vsyncpa [#allocation3], 0
    %7 = vsyncpa [#allocation4], 0
    // Predicated region
    $region2: #{tpu_custom_call.1} parent=1 // pred_check
      _
    $region3: #{tpu_custom_call.1} parent=1 // pred_check_branch
      %9 = sbr.rel (0) target = $region5
    $region4: #{tpu_custom_call.1} parent=1 // pred_region
      %s11 = ssub.s32 512, 512
      %12 = vsyncadd [#allocation3], %s11
      %s13 = sshll.u32 [#allocation2], 4
      %s14 = int_to_ptr.vmem [resolvable:$true] %s13
      %19 = dma.hbm_to_vmem [thread:$0]  %s0, 512, %s14, [#allocation3], 128, 128, 8
    $region5: #{tpu_custom_call.1} parent=1 // pred_fallthru
      _
    // Predicated region
    $region6: #{tpu_custom_call.1} parent=1 // pred_check
      _
    $region7: #{tpu_custom_call.1} parent=1 // pred_check_branch
      %21 = sbr.rel (0) target = $region9
    $region8: #{tpu_custom_call.1} parent=1 // pred_region
      %22 = dma.done [#allocation3], 512
    $region9: #{tpu_custom_call.1} parent=1 // pred_fallthru
      _
    %v23 = vld [vmem:[#allocation2] sm:$0xff]
    %v24 = vld [vmem:[#allocation2 + $0x8] sm:$0xff]
    %v25 = vld [vmem:[#allocation2 + $0x10] sm:$0xff]
    %v26 = vld [vmem:[#allocation2 + $0x18] sm:$0xff]
    %v27 = vshra.s32 %v23, 31
    %v28 = vshra.s32 %v24, 31
    %v29 = vshra.s32 %v25, 31
    %v30 = vshra.s32 %v26, 31
    %v31 = vand.u32 %v27, 1
    %v32 = vand.u32 %v28, 1
    %v33 = vand.u32 %v29, 1
    %v34 = vand.u32 %v30, 1
    %v35 = vpack.c.b16 %v32, %v31
    %v36 = vpack.c.b16 %v34, %v33
    %v37 = vpack.c.b8 %v36, %v35
    %38 = vst [vmem:[#allocation5] sm:$0xff] %v37
    %v39 = vld [vmem:[#allocation2] sm:$0xff]
    %v40 = vld [vmem:[#allocation2 + $0x8] sm:$0xff]
    %v41 = vld [vmem:[#allocation2 + $0x10] sm:$0xff]
    %v42 = vld [vmem:[#allocation2 + $0x18] sm:$0xff]
    %v43 = vshra.s32 %v39, 30
    %v44 = vshra.s32 %v40, 30
    %v45 = vshra.s32 %v41, 30
    %v46 = vshra.s32 %v42, 30
    %v47 = vand.u32 %v43, 1
    %v48 = vand.u32 %v44, 1
    %v49 = vand.u32 %v45, 1
    %v50 = vand.u32 %v46, 1
    %v51 = vpack.c.b16 %v48, %v47
    %v52 = vpack.c.b16 %v50, %v49
    %v53 = vpack.c.b8 %v52, %v51
    %s54 = scalar_lea.vmem [#allocation5], 8
    %55 = vst [vmem:[%s54] sm:$0xff] %v53
    %v56 = vld [vmem:[#allocation2] sm:$0xff]
    %v57 = vld [vmem:[#allocation2 + $0x8] sm:$0xff]
    %v58 = vld [vmem:[#allocation2 + $0x10] sm:$0xff]
    %v59 = vld [vmem:[#allocation2 + $0x18] sm:$0xff]
    %v60 = vshra.s32 %v56, 29
    %v61 = vshra.s32 %v57, 29
    %v62 = vshra.s32 %v58, 29
    %v63 = vshra.s32 %v59, 29
    %v64 = vand.u32 %v60, 1
    %v65 = vand.u32 %v61, 1
    %v66 = vand.u32 %v62, 1
    %v67 = vand.u32 %v63, 1
    %v68 = vpack.c.b16 %v65, %v64
    %v69 = vpack.c.b16 %v67, %v66
    %v70 = vpack.c.b8 %v69, %v68
    %s71 = scalar_lea.vmem [#allocation5], 16
    %72 = vst [vmem:[%s71] sm:$0xff] %v70
    %v73 = vld [vmem:[#allocation2] sm:$0xff]
    %v74 = vld [vmem:[#allocation2 + $0x8] sm:$0xff]
    %v75 = vld [vmem:[#allocation2 + $0x10] sm:$0xff]
    %v76 = vld [vmem:[#allocation2 + $0x18] sm:$0xff]
    %v77 = vshra.s32 %v73, 28
    %v78 = vshra.s32 %v74, 28
    %v79 = vshra.s32 %v75, 28
    %v80 = vshra.s32 %v76, 28
    %v81 = vand.u32 %v77, 1
    %v82 = vand.u32 %v78, 1
    %v83 = vand.u32 %v79, 1
    %v84 = vand.u32 %v80, 1
    %v85 = vpack.c.b16 %v82, %v81
    %v86 = vpack.c.b16 %v84, %v83
    %v87 = vpack.c.b8 %v86, %v85
    %s88 = scalar_lea.vmem [#allocation5], 24
    %89 = vst [vmem:[%s88] sm:$0xff] %v87
    %v90 = vld [vmem:[#allocation2] sm:$0xff]
    %v91 = vld [vmem:[#allocation2 + $0x8] sm:$0xff]
    %v92 = vld [vmem:[#allocation2 + $0x10] sm:$0xff]
    %v93 = vld [vmem:[#allocation2 + $0x18] sm:$0xff]
    %v94 = vshra.s32 %v90, 27
    %v95 = vshra.s32 %v91, 27
    %v96 = vshra.s32 %v92, 27
    %v97 = vshra.s32 %v93, 27
    %v98 = vand.u32 %v94, 1
    %v99 = vand.u32 %v95, 1
    %v100 = vand.u32 %v96, 1
    %v101 = vand.u32 %v97, 1
    %v102 = vpack.c.b16 %v99, %v98
    %v103 = vpack.c.b16 %v101, %v100
    %v104 = vpack.c.b8 %v103, %v102
    %s105 = scalar_lea.vmem [#allocation5], 32
    %106 = vst [vmem:[%s105] sm:$0xff] %v104
    %v107 = vld [vmem:[#allocation2] sm:$0xff]
    %v108 = vld [vmem:[#allocation2 + $0x8] sm:$0xff]
    %v109 = vld [vmem:[#allocation2 + $0x10] sm:$0xff]
    %v110 = vld [vmem:[#allocation2 + $0x18] sm:$0xff]
    %v111 = vshra.s32 %v107, 26
    %v112 = vshra.s32 %v108, 26
    %v113 = vshra.s32 %v109, 26
    %v114 = vshra.s32 %v110, 26
    %v115 = vand.u32 %v111, 1
    %v116 = vand.u32 %v112, 1
    %v117 = vand.u32 %v113, 1
    %v118 = vand.u32 %v114, 1
    %v119 = vpack.c.b16 %v116, %v115
    %v120 = vpack.c.b16 %v118, %v117
    %v121 = vpack.c.b8 %v120, %v119
    %s122 = scalar_lea.vmem [#allocation5], 40
    %123 = vst [vmem:[%s122] sm:$0xff] %v121
    %v124 = vld [vmem:[#allocation2] sm:$0xff]
    %v125 = vld [vmem:[#allocation2 + $0x8] sm:$0xff]
    %v126 = vld [vmem:[#allocation2 + $0x10] sm:$0xff]
    %v127 = vld [vmem:[#allocation2 + $0x18] sm:$0xff]
    %v128 = vshra.s32 %v124, 25
    %v129 = vshra.s32 %v125, 25
    %v130 = vshra.s32 %v126, 25
    %v131 = vshra.s32 %v127, 25
    %v132 = vand.u32 %v128, 1
    %v133 = vand.u32 %v129, 1
    %v134 = vand.u32 %v130, 1
    %v135 = vand.u32 %v131, 1
    %v136 = vpack.c.b16 %v133, %v132
    %v137 = vpack.c.b16 %v135, %v134
    %v138 = vpack.c.b8 %v137, %v136
    %s139 = scalar_lea.vmem [#allocation5], 48
    %140 = vst [vmem:[%s139] sm:$0xff] %v138
    %v141 = vld [vmem:[#allocation2] sm:$0xff]
    %v142 = vld [vmem:[#allocation2 + $0x8] sm:$0xff]
    %v143 = vld [vmem:[#allocation2 + $0x10] sm:$0xff]
    %v144 = vld [vmem:[#allocation2 + $0x18] sm:$0xff]
    %v145 = vshra.s32 %v141, 24
    %v146 = vshra.s32 %v142, 24
    %v147 = vshra.s32 %v143, 24
    %v148 = vshra.s32 %v144, 24
    %v149 = vand.u32 %v145, 1
    %v150 = vand.u32 %v146, 1
    %v151 = vand.u32 %v147, 1
    %v152 = vand.u32 %v148, 1
    %v153 = vpack.c.b16 %v150, %v149
    %v154 = vpack.c.b16 %v152, %v151
    %v155 = vpack.c.b8 %v154, %v153
    %s156 = scalar_lea.vmem [#allocation5], 56
    %157 = vst [vmem:[%s156] sm:$0xff] %v155
    %v158 = vld [vmem:[#allocation2] sm:$0xff]
    %v159 = vld [vmem:[#allocation2 + $0x8] sm:$0xff]
    %v160 = vld [vmem:[#allocation2 + $0x10] sm:$0xff]
    %v161 = vld [vmem:[#allocation2 + $0x18] sm:$0xff]
    %v162 = vshra.s32 %v158, 23
    %v163 = vshra.s32 %v159, 23
    %v164 = vshra.s32 %v160, 23
    %v165 = vshra.s32 %v161, 23
    %v166 = vand.u32 %v162, 1
    %v167 = vand.u32 %v163, 1
    %v168 = vand.u32 %v164, 1
    %v169 = vand.u32 %v165, 1
    %v170 = vpack.c.b16 %v167, %v166
    %v171 = vpack.c.b16 %v169, %v168
    %v172 = vpack.c.b8 %v171, %v170
    %s173 = scalar_lea.vmem [#allocation5], 64
    %174 = vst [vmem:[%s173] sm:$0xff] %v172
    %v175 = vld [vmem:[#allocation2] sm:$0xff]
    %v176 = vld [vmem:[#allocation2 + $0x8] sm:$0xff]
    %v177 = vld [vmem:[#allocation2 + $0x10] sm:$0xff]
    %v178 = vld [vmem:[#allocation2 + $0x18] sm:$0xff]
    %v179 = vshra.s32 %v175, 22
    %v180 = vshra.s32 %v176, 22
    %v181 = vshra.s32 %v177, 22
    %v182 = vshra.s32 %v178, 22
    %v183 = vand.u32 %v179, 1
    %v184 = vand.u32 %v180, 1
    %v185 = vand.u32 %v181, 1
    %v186 = vand.u32 %v182, 1
    %v187 = vpack.c.b16 %v184, %v183
    %v188 = vpack.c.b16 %v186, %v185
    %v189 = vpack.c.b8 %v188, %v187
    %s190 = scalar_lea.vmem [#allocation5], 72
    %191 = vst [vmem:[%s190] sm:$0xff] %v189
    %v192 = vld [vmem:[#allocation2] sm:$0xff]
    %v193 = vld [vmem:[#allocation2 + $0x8] sm:$0xff]
    %v194 = vld [vmem:[#allocation2 + $0x10] sm:$0xff]
    %v195 = vld [vmem:[#allocation2 + $0x18] sm:$0xff]
    %v196 = vshra.s32 %v192, 21
    %v197 = vshra.s32 %v193, 21
    %v198 = vshra.s32 %v194, 21
    %v199 = vshra.s32 %v195, 21
    %v200 = vand.u32 %v196, 1
    %v201 = vand.u32 %v197, 1
    %v202 = vand.u32 %v198, 1
    %v203 = vand.u32 %v199, 1
    %v204 = vpack.c.b16 %v201, %v200
    %v205 = vpack.c.b16 %v203, %v202
    %v206 = vpack.c.b8 %v205, %v204
    %s207 = scalar_lea.vmem [#allocation5], 80
    %208 = vst [vmem:[%s207] sm:$0xff] %v206
    %v209 = vld [vmem:[#allocation2] sm:$0xff]
    %v210 = vld [vmem:[#allocation2 + $0x8] sm:$0xff]
    %v211 = vld [vmem:[#allocation2 + $0x10] sm:$0xff]
    %v212 = vld [vmem:[#allocation2 + $0x18] sm:$0xff]
    %v213 = vshra.s32 %v209, 20
    %v214 = vshra.s32 %v210, 20
    %v215 = vshra.s32 %v211, 20
    %v216 = vshra.s32 %v212, 20
    %v217 = vand.u32 %v213, 1
    %v218 = vand.u32 %v214, 1
    %v219 = vand.u32 %v215, 1
    %v220 = vand.u32 %v216, 1
    %v221 = vpack.c.b16 %v218, %v217
    %v222 = vpack.c.b16 %v220, %v219
    %v223 = vpack.c.b8 %v222, %v221
    %s224 = scalar_lea.vmem [#allocation5], 88
    %225 = vst [vmem:[%s224] sm:$0xff] %v223
    %v226 = vld [vmem:[#allocation2] sm:$0xff]
    %v227 = vld [vmem:[#allocation2 + $0x8] sm:$0xff]
    %v228 = vld [vmem:[#allocation2 + $0x10] sm:$0xff]
    %v229 = vld [vmem:[#allocation2 + $0x18] sm:$0xff]
    %v230 = vshra.s32 %v226, 19
    %v231 = vshra.s32 %v227, 19
    %v232 = vshra.s32 %v228, 19
    %v233 = vshra.s32 %v229, 19
    %v234 = vand.u32 %v230, 1
    %v235 = vand.u32 %v231, 1
    %v236 = vand.u32 %v232, 1
    %v237 = vand.u32 %v233, 1
    %v238 = vpack.c.b16 %v235, %v234
    %v239 = vpack.c.b16 %v237, %v236
    %v240 = vpack.c.b8 %v239, %v238
    %s241 = scalar_lea.vmem [#allocation5], 96
    %242 = vst [vmem:[%s241] sm:$0xff] %v240
    %v243 = vld [vmem:[#allocation2] sm:$0xff]
    %v244 = vld [vmem:[#allocation2 + $0x8] sm:$0xff]
    %v245 = vld [vmem:[#allocation2 + $0x10] sm:$0xff]
    %v246 = vld [vmem:[#allocation2 + $0x18] sm:$0xff]
    %v247 = vshra.s32 %v243, 18
    %v248 = vshra.s32 %v244, 18
    %v249 = vshra.s32 %v245, 18
    %v250 = vshra.s32 %v246, 18
    %v251 = vand.u32 %v247, 1
    %v252 = vand.u32 %v248, 1
    %v253 = vand.u32 %v249, 1
    %v254 = vand.u32 %v250, 1
    %v255 = vpack.c.b16 %v252, %v251
    %v256 = vpack.c.b16 %v254, %v253
    %v257 = vpack.c.b8 %v256, %v255
    %s258 = scalar_lea.vmem [#allocation5], 104
    %259 = vst [vmem:[%s258] sm:$0xff] %v257
    %v260 = vld [vmem:[#allocation2] sm:$0xff]
    %v261 = vld [vmem:[#allocation2 + $0x8] sm:$0xff]
    %v262 = vld [vmem:[#allocation2 + $0x10] sm:$0xff]
    %v263 = vld [vmem:[#allocation2 + $0x18] sm:$0xff]
    %v264 = vshra.s32 %v260, 17
    %v265 = vshra.s32 %v261, 17
    %v266 = vshra.s32 %v262, 17
    %v267 = vshra.s32 %v263, 17
    %v268 = vand.u32 %v264, 1
    %v269 = vand.u32 %v265, 1
    %v270 = vand.u32 %v266, 1
    %v271 = vand.u32 %v267, 1
    %v272 = vpack.c.b16 %v269, %v268
    %v273 = vpack.c.b16 %v271, %v270
    %v274 = vpack.c.b8 %v273, %v272
    %s275 = scalar_lea.vmem [#allocation5], 112
    %276 = vst [vmem:[%s275] sm:$0xff] %v274
    %v277 = vld [vmem:[#allocation2] sm:$0xff]
    %v278 = vld [vmem:[#allocation2 + $0x8] sm:$0xff]
    %v279 = vld [vmem:[#allocation2 + $0x10] sm:$0xff]
    %v280 = vld [vmem:[#allocation2 + $0x18] sm:$0xff]
    %v281 = vshra.s32 %v277, 16
    %v282 = vshra.s32 %v278, 16
    %v283 = vshra.s32 %v279, 16
    %v284 = vshra.s32 %v280, 16
    %v285 = vand.u32 %v281, 1
    %v286 = vand.u32 %v282, 1
    %v287 = vand.u32 %v283, 1
    %v288 = vand.u32 %v284, 1
    %v289 = vpack.c.b16 %v286, %v285
    %v290 = vpack.c.b16 %v288, %v287
    %v291 = vpack.c.b8 %v290, %v289
    %s292 = scalar_lea.vmem [#allocation5], 120
    %293 = vst [vmem:[%s292] sm:$0xff] %v291
    %v294 = vld [vmem:[#allocation2] sm:$0xff]
    %v295 = vld [vmem:[#allocation2 + $0x8] sm:$0xff]
    %v296 = vld [vmem:[#allocation2 + $0x10] sm:$0xff]
    %v297 = vld [vmem:[#allocation2 + $0x18] sm:$0xff]
    %v298 = vshra.s32 %v294, 15
    %v299 = vshra.s32 %v295, 15
    %v300 = vshra.s32 %v296, 15
    %v301 = vshra.s32 %v297, 15
    %v302 = vand.u32 %v298, 1
    %v303 = vand.u32 %v299, 1
    %v304 = vand.u32 %v300, 1
    %v305 = vand.u32 %v301, 1
    %v306 = vpack.c.b16 %v303, %v302
    %v307 = vpack.c.b16 %v305, %v304
    %v308 = vpack.c.b8 %v307, %v306
    %s309 = scalar_lea.vmem [#allocation5], 128
    %310 = vst [vmem:[%s309] sm:$0xff] %v308
    %v311 = vld [vmem:[#allocation2] sm:$0xff]
    %v312 = vld [vmem:[#allocation2 + $0x8] sm:$0xff]
    %v313 = vld [vmem:[#allocation2 + $0x10] sm:$0xff]
    %v314 = vld [vmem:[#allocation2 + $0x18] sm:$0xff]
    %v315 = vshra.s32 %v311, 14
    %v316 = vshra.s32 %v312, 14
    %v317 = vshra.s32 %v313, 14
    %v318 = vshra.s32 %v314, 14
    %v319 = vand.u32 %v315, 1
    %v320 = vand.u32 %v316, 1
    %v321 = vand.u32 %v317, 1
    %v322 = vand.u32 %v318, 1
    %v323 = vpack.c.b16 %v320, %v319
    %v324 = vpack.c.b16 %v322, %v321
    %v325 = vpack.c.b8 %v324, %v323
    %s326 = scalar_lea.vmem [#allocation5], 136
    %327 = vst [vmem:[%s326] sm:$0xff] %v325
    %v328 = vld [vmem:[#allocation2] sm:$0xff]
    %v329 = vld [vmem:[#allocation2 + $0x8] sm:$0xff]
    %v330 = vld [vmem:[#allocation2 + $0x10] sm:$0xff]
    %v331 = vld [vmem:[#allocation2 + $0x18] sm:$0xff]
    %v332 = vshra.s32 %v328, 13
    %v333 = vshra.s32 %v329, 13
    %v334 = vshra.s32 %v330, 13
    %v335 = vshra.s32 %v331, 13
    %v336 = vand.u32 %v332, 1
    %v337 = vand.u32 %v333, 1
    %v338 = vand.u32 %v334, 1
    %v339 = vand.u32 %v335, 1
    %v340 = vpack.c.b16 %v337, %v336
    %v341 = vpack.c.b16 %v339, %v338
    %v342 = vpack.c.b8 %v341, %v340
    %s343 = scalar_lea.vmem [#allocation5], 144
    %344 = vst [vmem:[%s343] sm:$0xff] %v342
    %v345 = vld [vmem:[#allocation2] sm:$0xff]
    %v346 = vld [vmem:[#allocation2 + $0x8] sm:$0xff]
    %v347 = vld [vmem:[#allocation2 + $0x10] sm:$0xff]
    %v348 = vld [vmem:[#allocation2 + $0x18] sm:$0xff]
    %v349 = vshra.s32 %v345, 12
    %v350 = vshra.s32 %v346, 12
    %v351 = vshra.s32 %v347, 12
    %v352 = vshra.s32 %v348, 12
    %v353 = vand.u32 %v349, 1
    %v354 = vand.u32 %v350, 1
    %v355 = vand.u32 %v351, 1
    %v356 = vand.u32 %v352, 1
    %v357 = vpack.c.b16 %v354, %v353
    %v358 = vpack.c.b16 %v356, %v355
    %v359 = vpack.c.b8 %v358, %v357
    %s360 = scalar_lea.vmem [#allocation5], 152
    %361 = vst [vmem:[%s360] sm:$0xff] %v359
    %v362 = vld [vmem:[#allocation2] sm:$0xff]
    %v363 = vld [vmem:[#allocation2 + $0x8] sm:$0xff]
    %v364 = vld [vmem:[#allocation2 + $0x10] sm:$0xff]
    %v365 = vld [vmem:[#allocation2 + $0x18] sm:$0xff]
    %v366 = vshra.s32 %v362, 11
    %v367 = vshra.s32 %v363, 11
    %v368 = vshra.s32 %v364, 11
    %v369 = vshra.s32 %v365, 11
    %v370 = vand.u32 %v366, 1
    %v371 = vand.u32 %v367, 1
    %v372 = vand.u32 %v368, 1
    %v373 = vand.u32 %v369, 1
    %v374 = vpack.c.b16 %v371, %v370
    %v375 = vpack.c.b16 %v373, %v372
    %v376 = vpack.c.b8 %v375, %v374
    %s377 = scalar_lea.vmem [#allocation5], 160
    %378 = vst [vmem:[%s377] sm:$0xff] %v376
    %v379 = vld [vmem:[#allocation2] sm:$0xff]
    %v380 = vld [vmem:[#allocation2 + $0x8] sm:$0xff]
    %v381 = vld [vmem:[#allocation2 + $0x10] sm:$0xff]
    %v382 = vld [vmem:[#allocation2 + $0x18] sm:$0xff]
    %v383 = vshra.s32 %v379, 10
    %v384 = vshra.s32 %v380, 10
    %v385 = vshra.s32 %v381, 10
    %v386 = vshra.s32 %v382, 10
    %v387 = vand.u32 %v383, 1
    %v388 = vand.u32 %v384, 1
    %v389 = vand.u32 %v385, 1
    %v390 = vand.u32 %v386, 1
    %v391 = vpack.c.b16 %v388, %v387
    %v392 = vpack.c.b16 %v390, %v389
    %v393 = vpack.c.b8 %v392, %v391
    %s394 = scalar_lea.vmem [#allocation5], 168
    %395 = vst [vmem:[%s394] sm:$0xff] %v393
    %v396 = vld [vmem:[#allocation2] sm:$0xff]
    %v397 = vld [vmem:[#allocation2 + $0x8] sm:$0xff]
    %v398 = vld [vmem:[#allocation2 + $0x10] sm:$0xff]
    %v399 = vld [vmem:[#allocation2 + $0x18] sm:$0xff]
    %v400 = vshra.s32 %v396, 9
    %v401 = vshra.s32 %v397, 9
    %v402 = vshra.s32 %v398, 9
    %v403 = vshra.s32 %v399, 9
    %v404 = vand.u32 %v400, 1
    %v405 = vand.u32 %v401, 1
    %v406 = vand.u32 %v402, 1
    %v407 = vand.u32 %v403, 1
    %v408 = vpack.c.b16 %v405, %v404
    %v409 = vpack.c.b16 %v407, %v406
    %v410 = vpack.c.b8 %v409, %v408
    %s411 = scalar_lea.vmem [#allocation5], 176
    %412 = vst [vmem:[%s411] sm:$0xff] %v410
    %v413 = vld [vmem:[#allocation2] sm:$0xff]
    %v414 = vld [vmem:[#allocation2 + $0x8] sm:$0xff]
    %v415 = vld [vmem:[#allocation2 + $0x10] sm:$0xff]
    %v416 = vld [vmem:[#allocation2 + $0x18] sm:$0xff]
    %v417 = vshra.s32 %v413, 8
    %v418 = vshra.s32 %v414, 8
    %v419 = vshra.s32 %v415, 8
    %v420 = vshra.s32 %v416, 8
    %v421 = vand.u32 %v417, 1
    %v422 = vand.u32 %v418, 1
    %v423 = vand.u32 %v419, 1
    %v424 = vand.u32 %v420, 1
    %v425 = vpack.c.b16 %v422, %v421
    %v426 = vpack.c.b16 %v424, %v423
    %v427 = vpack.c.b8 %v426, %v425
    %s428 = scalar_lea.vmem [#allocation5], 184
    %429 = vst [vmem:[%s428] sm:$0xff] %v427
    // Predicated region
    $region10: #{tpu_custom_call.1} parent=1 // pred_check
      _
    $region11: #{tpu_custom_call.1} parent=1 // pred_check_branch
      %431 = sbr.rel (0) target = $region13
    $region12: #{tpu_custom_call.1} parent=1 // pred_region
      %s433 = ssub.s32 3072, 3072
      %434 = vsyncadd [#allocation4], %s433
      %s435 = sshll.u32 [#allocation5], 4
      %s436 = int_to_ptr.vmem [resolvable:$true] %s435
      %441 = dma.vmem_to_hbm [thread:$0]  %s436, 3072, %s1, [#allocation4], 128, 128, 8
    $region13: #{tpu_custom_call.1} parent=1 // pred_fallthru
      _
    // Predicated region
    $region14: #{tpu_custom_call.1} parent=1 // pred_check
      _
    $region15: #{tpu_custom_call.1} parent=1 // pred_check_branch
      %443 = sbr.rel (0) target = $region17
    $region16: #{tpu_custom_call.1} parent=1 // pred_region
      %444 = dma.done [#allocation4], 3072
    $region17: #{tpu_custom_call.1} parent=1 // pred_fallthru
      _
    %445 = vsyncpa [#allocation3], 1
    %446 = vsyncpa [#allocation4], 1

</llo_original>
